<compile_context>
chip_gen: v5e
topology: v5e:2x2
jax: 0.10.0
libtpu: 0.0.40
codegen_flags: <defaults>
</compile_context>

<pallas_src>
import functools

import jax
import jax.numpy as jnp
from jax import lax
from jax.experimental import pallas as pl
from jax.experimental.pallas import tpu as pltpu


def _round_up(x, m):
    return (x + m - 1) // m * m


def _cdiv(a, b):
    return (a + b - 1) // b


# ----------------------------------------------------------------------------
# Fused kernel: streams H-tiles of all four inputs once, accumulates
#   - weighted squared-error sum (pos/col weights + mean divisors pre-folded)
#   - sum of -log(gathered recon_label) over valid pixels
#   - count of valid pixels
# and emits one (8,128) partial row per "core" grid index.
# ----------------------------------------------------------------------------
def _fused_loss_kernel(recon_ref, pix_ref, rlabel_ref, label_ref, out_ref,
                       pcl_acc, nll_acc, cnt_acc,
                       *, NT, H, th, pos_scale, col_scale, ignore_label):
    t = pl.program_id(1)
    tile_idx = pl.program_id(0) * NT + t          # unclamped global H-tile index

    @pl.when(t == 0)
    def _():
        pcl_acc[...] = jnp.zeros_like(pcl_acc)
        nll_acc[...] = jnp.zeros_like(nll_acc)
        cnt_acc[...] = jnp.zeros_like(cnt_acc)

    W = recon_ref.shape[-1]
    # In-kernel mask for the ragged last H-tile and for fully out-of-range
    # (clamped/duplicated) tiles -- replaces the old wrapper-side jnp.pad.
    row = lax.broadcasted_iota(jnp.int32, (1, 1, th, W), 2)
    hvalid = (tile_idx * th + row) < H            # (1, 1, th, W) bool

    # ---- loss1: weighted MSE over position (ch<2) / color (ch>=2) channels ----
    d = recon_ref[...].astype(jnp.float32) - pix_ref[...].astype(jnp.float32)
    Cf = d.shape[1]
    ch = lax.broadcasted_iota(jnp.int32, (1, Cf, 1, 1), 1)
    w = jnp.where(ch < 2, jnp.float32(pos_scale), jnp.float32(col_scale))
    pcl_acc[...] += jnp.sum(jnp.where(hvalid, d * d * w, 0.0), axis=(0, 1))

    # ---- loss2: -log(recon_label[b, label, h, w]) over non-ignored pixels -----
    x = rlabel_ref[...].astype(jnp.float32)       # (B, Cl, th, W)
    lbl = label_ref[...]                          # (B, 1,  th, W) int32
    valid = jnp.logical_and(lbl != ignore_label, hvalid)              # (B,1,th,W)
    chl = lax.broadcasted_iota(jnp.int32, x.shape, 1)
    gathered = jnp.sum(jnp.where(chl == lbl, x, 0.0), axis=1, keepdims=True)
    neglog = -jnp.log(jnp.where(valid, gathered, 1.0))
    nll_acc[...] += jnp.sum(jnp.where(valid, neglog, 0.0), axis=(0, 1))
    cnt_acc[...] += jnp.sum(valid.astype(jnp.float32), axis=(0, 1))

    # ---- finalize: single full reduction per core, written to this core's row --
    @pl.when(t == NT - 1)
    def _():
        lane = lax.broadcasted_iota(jnp.int32, out_ref.shape, 2)
        vals = jnp.where(lane == 0, jnp.sum(pcl_acc[...]),
               jnp.where(lane == 1, jnp.sum(nll_acc[...]),
               jnp.where(lane == 2, jnp.sum(cnt_acc[...]), 0.0)))
        out_ref[...] = vals


# ----------------------------------------------------------------------------
# Loss.forward equivalent (fused)
# ----------------------------------------------------------------------------
def loss_forward(recon_feat2, pixel_feature, recon_label, label, *,
                 pos_weight=0.0, col_weight=0.0, loss_weight=1.0, ignore_label=255,
                 tile_h=None):
    """recon_feat2/pixel_feature: (B, Cf, H, W); recon_label: (B, Cl, H, W);
    label: (B, 1, H, W) int (ignore_label marks ignored pixels)."""
    B, Cf, H, W = recon_feat2.shape
    assert pixel_feature.shape == recon_feat2.shape
    Bl, Cl, Hl, Wl = recon_label.shape
    assert (Bl, Hl, Wl) == (B, H, W)
    assert label.shape == (B, 1, H, W)

    label32 = label.astype(jnp.int32)             # no-op if already int32

    feat_isz = jnp.dtype(recon_feat2.dtype).itemsize
    rlbl_isz = jnp.dtype(recon_label.dtype).itemsize

    if tile_h is None:
        # ~4 MiB of input per grid step (x2 pipeline buffers stays well inside
        # the 32 MiB limit below and v7x's 64 MiB physical VMEM).
        w_eff = _round_up(W, 128)
        row_bytes = w_eff * (2 * B * Cf * feat_isz + B * Cl * rlbl_isz + B * 4)
        tile_h = max(32, (4 * 1024 * 1024 // max(row_bytes, 1)) // 32 * 32)
        # TODO(synk): also tile W (when W % 128 == 0) if a single H-row set of all
        # inputs ever exceeds the VMEM budget at tile_h=8 (huge Cl * W).
    th = int(tile_h)
    if th >= H:
        th = H                                   # full-dim block (no 8-divisibility need)
    else:
        th = max(8, th // 8 * 8)                 # sublane-aligned tile

    n_tiles = _cdiv(H, th)
    NC = 2 if n_tiles >= 2 else 1                # 2 partials -> both TCs on v7x
    NT = _cdiv(n_tiles, NC)

    def h_map(ci, ti):
        # clamp duplicated tiles of the second core; they are fully masked in-kernel
        hb = jnp.minimum(ci * NT + ti, n_tiles - 1)
        return (0, 0, hb, 0)

    pos_count = float(max(B * 2 * H * W, 1))
    col_count = float(max(B * (Cf - 2) * H * W, 1))

    kernel = functools.partial(
        _fused_loss_kernel,
        NT=NT, H=H, th=th,
        pos_scale=float(pos_weight) / pos_count,
        col_scale=float(col_weight) / col_count,
        ignore_label=int(ignore_label),
    )

    partials = pl.pallas_call(
        kernel,
        out_shape=jax.ShapeDtypeStruct((NC, 8, 128), jnp.float32),
        grid=(NC, NT),
        in_specs=[
            pl.BlockSpec((B, Cf, th, W), h_map),
            pl.BlockSpec((B, Cf, th, W), h_map),
            pl.BlockSpec((B, Cl, th, W), h_map),
            pl.BlockSpec((B, 1, th, W), h_map),
        ],
        out_specs=pl.BlockSpec((1, 8, 128), lambda ci, ti: (ci, 0, 0)),
        scratch_shapes=[
            pltpu.VMEM((th, W), jnp.float32),    # weighted squared-error partial
            pltpu.VMEM((th, W), jnp.float32),    # -log sum partial
            pltpu.VMEM((th, W), jnp.float32),    # valid-pixel count partial
        ],
        compiler_params=pltpu.CompilerParams(
            dimension_semantics=("parallel", "arbitrary"),
            vmem_limit_bytes=32 * 1024 * 1024,
        ),
    )(recon_feat2, pixel_feature, recon_label, label32)

    loss1 = jnp.sum(partials[:, 0, 0])
    nll_sum = jnp.sum(partials[:, 0, 1])
    cnt = jnp.sum(partials[:, 0, 2])
    # NOTE: like the PyTorch reference, this is NaN if every pixel is ignored.
    loss2 = (nll_sum / cnt) * jnp.float32(loss_weight)
    return loss2 + loss1, loss1, loss2


# ----------------------------------------------------------------------------
# Pure-JAX reference
# ----------------------------------------------------------------------------
def _reference(recon_feat, pixel_feat, recon_label, label,
               pos_w, col_w, loss_w, ignore_label):
    pos_loss = jnp.mean((recon_feat[:, :2] - pixel_feat[:, :2]) ** 2)
    col_loss = jnp.mean((recon_feat[:, 2:] - pixel_feat[:, 2:]) ** 2)
    loss1 = pos_loss * pos_w + col_loss * col_w

    lbl = label[:, 0]
    ignore = lbl == ignore_label
    lbl_eff = jnp.where(ignore, 0, lbl)
    gathered = jnp.take_along_axis(recon_label, lbl_eff[:, None, :, :], axis=1)[:, 0]
    valid = jnp.logical_not(ignore)
    neglog = -jnp.log(jnp.where(valid, gathered, 1.0))
    loss2 = (jnp.sum(jnp.where(valid, neglog, 0.0)) /
             jnp.sum(valid.astype(jnp.float32))) * loss_w
    return loss2 + loss1, loss1, loss2


if __name__ == "__main__":
    key = jax.random.PRNGKey(0)
    k1, k2, k3, k4, k5 = jax.random.split(key, 5)

    # H=36 deliberately not a multiple of the forced tile (8) to exercise the
    # in-kernel ragged-tail mask and the clamped/duplicated last tile of core 1.
    B, C_feat, H, W = 2, 5, 36, 32      # features: RGB (3) + XY (2)
    C_lbl = 8                           # label classes

    recon_feat2 = jax.random.normal(k1, (B, C_feat, H, W), dtype=jnp.float32)
    pixel_feature = jax.random.normal(k2, (B, C_feat, H, W), dtype=jnp.float32)

    logits = jax.random.normal(k3, (B, C_lbl, H, W), dtype=jnp.float32)
    recon_label = jax.nn.softmax(logits, axis=1)   # positive "soft threshold" label
    label = jax.random.randint(k4, (B, 1, H, W), 0, C_lbl).astype(jnp.int32)
    ignore_mask = jax.random.uniform(k5, (B, 1, H, W)) < 0.1
    label = jnp.where(ignore_mask, 255, label)

    pos_w, col_w, loss_w, ign = 0.5, 1.5, 1.0, 255

    ref_total, ref_l1, ref_l2 = _reference(
        recon_feat2, pixel_feature, recon_label, label, pos_w, col_w, loss_w, ign)

    # 1) forced small tile: multi-step grid, 2-core partials, ragged-tail masking
    total, l1, l2 = loss_forward(
        recon_feat2, pixel_feature, recon_label, label,
        pos_weight=pos_w, col_weight=col_w, loss_weight=loss_w, ignore_label=ign,
        tile_h=8)
    total = jax.block_until_ready(total)
    assert jnp.allclose(l1, ref_l1, rtol=1e-5, atol=1e-5), (l1, ref_l1)
    assert jnp.allclose(l2, ref_l2, rtol=1e-5, atol=1e-5), (l2, ref_l2)
    assert jnp.allclose(total, ref_total, rtol=1e-5, atol=1e-5), (total, ref_total)

    # 2) default heuristic tile: single-tile / single-core path
    total_d, l1_d, l2_d = loss_forward(
        recon_feat2, pixel_feature, recon_label, label,
        pos_weight=pos_w, col_weight=col_w, loss_weight=loss_w, ignore_label=ign)
    total_d = jax.block_until_ready(total_d)
    assert jnp.allclose(l1_d, ref_l1, rtol=1e-5, atol=1e-5), (l1_d, ref_l1)
    assert jnp.allclose(l2_d, ref_l2, rtol=1e-5, atol=1e-5), (l2_d, ref_l2)
    assert jnp.allclose(total_d, ref_total, rtol=1e-5, atol=1e-5), (total_d, ref_total)

    print("KERNEL_OK")
</pallas_src>

<mosaic_0001>
module attributes {stable_mosaic.version = 11 : i64} {
  func.func @_fused_loss_kernel(%arg0: i32, %arg1: i32, %arg2: memref<2x5x8x32xf32, #tpu.memory_space<vmem>>, %arg3: memref<2x5x8x32xf32, #tpu.memory_space<vmem>>, %arg4: memref<2x8x8x32xf32, #tpu.memory_space<vmem>>, %arg5: memref<2x1x8x32xi32, #tpu.memory_space<vmem>>, %arg6: memref<1x8x128xf32, #tpu.memory_space<vmem>>, %arg7: memref<8x32xf32, #tpu.memory_space<vmem>>, %arg8: memref<8x32xf32, #tpu.memory_space<vmem>>, %arg9: memref<8x32xf32, #tpu.memory_space<vmem>>) attributes {dimension_semantics = [#tpu.dimension_semantics<parallel>, #tpu.dimension_semantics<arbitrary>], iteration_bounds = array<i64: 2, 3>, scalar_prefetch = 0 : i64, scratch_operands = 3 : i64, tpu.core_type = #tpu.core_type<tc>, window_params = [{transform_indices = @transform_0, window_bounds = array<i64: 2, 5, 8, 32>}, {transform_indices = @transform_1, window_bounds = array<i64: 2, 5, 8, 32>}, {transform_indices = @transform_2, window_bounds = array<i64: 2, 8, 8, 32>}, {transform_indices = @transform_3, window_bounds = array<i64: 2, 1, 8, 32>}, {transform_indices = @transform_4, window_bounds = array<i64: 1, 8, 128>}]} {
    %c3_i32 = arith.constant 3 : i32
    %0 = arith.muli %arg0, %c3_i32 : i32
    %1 = arith.addi %0, %arg1 : i32
    %c0_i32 = arith.constant 0 : i32
    %2 = arith.cmpi eq, %arg1, %c0_i32 : i32
    %3 = arith.extui %2 : i1 to i32
    %c0_i32_0 = arith.constant 0 : i32
    %4 = arith.cmpi ne, %3, %c0_i32_0 : i32
    scf.if %4 {
      %cst_40 = arith.constant 0.000000e+00 : f32
      %64 = vector.broadcast %cst_40 : f32 to vector<8x32xf32>
      %c0_41 = arith.constant 0 : index
      %c0_42 = arith.constant 0 : index
      %65 = vector.load %arg7[%c0_41, %c0_42] : memref<8x32xf32, #tpu.memory_space<vmem>>, vector<8x32xf32>
      tpu.vector_store %arg7[%c0_41, %c0_42], %64 {strides = array<i32>} : memref<8x32xf32, #tpu.memory_space<vmem>>, vector<8x32xf32>,
      %cst_43 = arith.constant 0.000000e+00 : f32
      %66 = vector.broadcast %cst_43 : f32 to vector<8x32xf32>
      %c0_44 = arith.constant 0 : index
      %c0_45 = arith.constant 0 : index
      %67 = vector.load %arg8[%c0_44, %c0_45] : memref<8x32xf32, #tpu.memory_space<vmem>>, vector<8x32xf32>
      tpu.vector_store %arg8[%c0_44, %c0_45], %66 {strides = array<i32>} : memref<8x32xf32, #tpu.memory_space<vmem>>, vector<8x32xf32>,
      %cst_46 = arith.constant 0.000000e+00 : f32
      %68 = vector.broadcast %cst_46 : f32 to vector<8x32xf32>
      %c0_47 = arith.constant 0 : index
      %c0_48 = arith.constant 0 : index
      %69 = vector.load %arg9[%c0_47, %c0_48] : memref<8x32xf32, #tpu.memory_space<vmem>>, vector<8x32xf32>
      tpu.vector_store %arg9[%c0_47, %c0_48], %68 {strides = array<i32>} : memref<8x32xf32, #tpu.memory_space<vmem>>, vector<8x32xf32>,
    } else {
    }
    %5 = tpu.iota {dimensions = array<i32: 2>} : vector<1x1x8x32xi32>
    %c8_i32 = arith.constant 8 : i32
    %6 = arith.muli %1, %c8_i32 : i32
    %7 = vector.broadcast %6 : i32 to vector<1x1x8x32xi32>
    %8 = arith.addi %7, %5 : vector<1x1x8x32xi32>
    %c36_i32 = arith.constant 36 : i32
    %9 = vector.broadcast %c36_i32 : i32 to vector<1x1x8x32xi32>
    %10 = arith.cmpi slt, %8, %9 : vector<1x1x8x32xi32>
    %c0 = arith.constant 0 : index
    %c0_1 = arith.constant 0 : index
    %c0_2 = arith.constant 0 : index
    %c0_3 = arith.constant 0 : index
    %11 = vector.load %arg2[%c0, %c0_1, %c0_2, %c0_3] : memref<2x5x8x32xf32, #tpu.memory_space<vmem>>, vector<2x5x8x32xf32>
    %c0_4 = arith.constant 0 : index
    %c0_5 = arith.constant 0 : index
    %c0_6 = arith.constant 0 : index
    %c0_7 = arith.constant 0 : index
    %12 = vector.load %arg3[%c0_4, %c0_5, %c0_6, %c0_7] : memref<2x5x8x32xf32, #tpu.memory_space<vmem>>, vector<2x5x8x32xf32>
    %13 = arith.subf %11, %12 : vector<2x5x8x32xf32>
    %14 = tpu.iota {dimensions = array<i32: 1>} : vector<1x5x1x1xi32>
    %c2_i32 = arith.constant 2 : i32
    %15 = vector.broadcast %c2_i32 : i32 to vector<1x5x1x1xi32>
    %16 = arith.cmpi slt, %14, %15 : vector<1x5x1x1xi32>
    %cst = arith.constant 1.08506945E-4 : f32
    %cst_8 = arith.constant 2.17013891E-4 : f32
    %17 = vector.broadcast %cst : f32 to vector<1x5x1x1xf32>
    %18 = vector.broadcast %cst_8 : f32 to vector<1x5x1x1xf32>
    %19 = arith.select %16, %17, %18 : vector<1x5x1x1xi1>, vector<1x5x1x1xf32>
    %c0_9 = arith.constant 0 : index
    %c0_10 = arith.constant 0 : index
    %20 = vector.load %arg7[%c0_9, %c0_10] : memref<8x32xf32, #tpu.memory_space<vmem>>, vector<8x32xf32>
    %21 = arith.mulf %13, %13 : vector<2x5x8x32xf32>
    %22 = vector.broadcast %19 : vector<1x5x1x1xf32> to vector<2x5x8x32xf32>
    %23 = arith.mulf %21, %22 : vector<2x5x8x32xf32>
    %cst_11 = arith.constant 0.000000e+00 : f32
    %24 = vector.shape_cast %10 : vector<1x1x8x32xi1> to vector<1x1x8x32xi1>
    %25 = vector.broadcast %24 : vector<1x1x8x32xi1> to vector<2x5x8x32xi1>
    %26 = vector.broadcast %cst_11 : f32 to vector<2x5x8x32xf32>
    %27 = arith.select %25, %23, %26 : vector<2x5x8x32xi1>, vector<2x5x8x32xf32>
    %cst_12 = arith.constant dense<0.000000e+00> : vector<8x32xf32>
    %28 = vector.multi_reduction <add>, %27, %cst_12 [0, 1] : vector<2x5x8x32xf32> to vector<8x32xf32>
    %29 = arith.addf %20, %28 : vector<8x32xf32>
    %c0_13 = arith.constant 0 : index
    %c0_14 = arith.constant 0 : index
    %30 = vector.load %arg7[%c0_13, %c0_14] : memref<8x32xf32, #tpu.memory_space<vmem>>, vector<8x32xf32>
    tpu.vector_store %arg7[%c0_13, %c0_14], %29 {strides = array<i32>} : memref<8x32xf32, #tpu.memory_space<vmem>>, vector<8x32xf32>,
    %c0_15 = arith.constant 0 : index
    %c0_16 = arith.constant 0 : index
    %c0_17 = arith.constant 0 : index
    %c0_18 = arith.constant 0 : index
    %31 = vector.load %arg4[%c0_15, %c0_16, %c0_17, %c0_18] : memref<2x8x8x32xf32, #tpu.memory_space<vmem>>, vector<2x8x8x32xf32>
    %c0_19 = arith.constant 0 : index
    %c0_20 = arith.constant 0 : index
    %c0_21 = arith.constant 0 : index
    %c0_22 = arith.constant 0 : index
    %32 = vector.load %arg5[%c0_19, %c0_20, %c0_21, %c0_22] : memref<2x1x8x32xi32, #tpu.memory_space<vmem>>, vector<2x1x8x32xi32>
    %c255_i32 = arith.constant 255 : i32
    %33 = vector.broadcast %c255_i32 : i32 to vector<2x1x8x32xi32>
    %34 = arith.cmpi ne, %32, %33 : vector<2x1x8x32xi32>
    %35 = vector.broadcast %10 : vector<1x1x8x32xi1> to vector<2x1x8x32xi1>
    %36 = arith.andi %34, %35 : vector<2x1x8x32xi1>
    %37 = tpu.iota {dimensions = array<i32: 1>} : vector<2x8x8x32xi32>
    %38 = vector.broadcast %32 : vector<2x1x8x32xi32> to vector<2x8x8x32xi32>
    %39 = arith.cmpi eq, %37, %38 : vector<2x8x8x32xi32>
    %cst_23 = arith.constant 0.000000e+00 : f32
    %40 = vector.broadcast %cst_23 : f32 to vector<2x8x8x32xf32>
    %41 = arith.select %39, %31, %40 : vector<2x8x8x32xi1>, vector<2x8x8x32xf32>
    %cst_24 = arith.constant dense<0.000000e+00> : vector<2x8x32xf32>
    %42 = vector.multi_reduction <add>, %41, %cst_24 [1] : vector<2x8x8x32xf32> to vector<2x8x32xf32>
    %43 = vector.shape_cast %42 : vector<2x8x32xf32> to vector<2x1x8x32xf32>
    %cst_25 = arith.constant 1.000000e+00 : f32
    %44 = vector.broadcast %cst_25 : f32 to vector<2x1x8x32xf32>
    %45 = arith.select %36, %43, %44 : vector<2x1x8x32xi1>, vector<2x1x8x32xf32>
    %46 = math.log %45 : vector<2x1x8x32xf32>
    %cst_26 = arith.constant 0.000000e+00 : f32
    %47 = vector.broadcast %cst_26 : f32 to vector<2x1x8x32xf32>
    %48 = arith.subf %47, %46 : vector<2x1x8x32xf32>
    %c0_27 = arith.constant 0 : index
    %c0_28 = arith.constant 0 : index
    %49 = vector.load %arg8[%c0_27, %c0_28] : memref<8x32xf32, #tpu.memory_space<vmem>>, vector<8x32xf32>
    %cst_29 = arith.constant 0.000000e+00 : f32
    %50 = vector.broadcast %cst_29 : f32 to vector<2x1x8x32xf32>
    %51 = arith.select %36, %48, %50 : vector<2x1x8x32xi1>, vector<2x1x8x32xf32>
    %cst_30 = arith.constant dense<0.000000e+00> : vector<8x32xf32>
    %52 = vector.multi_reduction <add>, %51, %cst_30 [0, 1] : vector<2x1x8x32xf32> to vector<8x32xf32>
    %53 = arith.addf %49, %52 : vector<8x32xf32>
    %c0_31 = arith.constant 0 : index
    %c0_32 = arith.constant 0 : index
    %54 = vector.load %arg8[%c0_31, %c0_32] : memref<8x32xf32, #tpu.memory_space<vmem>>, vector<8x32xf32>
    tpu.vector_store %arg8[%c0_31, %c0_32], %53 {strides = array<i32>} : memref<8x32xf32, #tpu.memory_space<vmem>>, vector<8x32xf32>,
    %c0_33 = arith.constant 0 : index
    %c0_34 = arith.constant 0 : index
    %55 = vector.load %arg9[%c0_33, %c0_34] : memref<8x32xf32, #tpu.memory_space<vmem>>, vector<8x32xf32>
    %56 = arith.extui %36 : vector<2x1x8x32xi1> to vector<2x1x8x32xi32>
    %57 = arith.sitofp %56 : vector<2x1x8x32xi32> to vector<2x1x8x32xf32>
    %cst_35 = arith.constant dense<0.000000e+00> : vector<8x32xf32>
    %58 = vector.multi_reduction <add>, %57, %cst_35 [0, 1] : vector<2x1x8x32xf32> to vector<8x32xf32>
    %59 = arith.addf %55, %58 : vector<8x32xf32>
    %c0_36 = arith.constant 0 : index
    %c0_37 = arith.constant 0 : index
    %60 = vector.load %arg9[%c0_36, %c0_37] : memref<8x32xf32, #tpu.memory_space<vmem>>, vector<8x32xf32>
    tpu.vector_store %arg9[%c0_36, %c0_37], %59 {strides = array<i32>} : memref<8x32xf32, #tpu.memory_space<vmem>>, vector<8x32xf32>,
    %c2_i32_38 = arith.constant 2 : i32
    %61 = arith.cmpi eq, %arg1, %c2_i32_38 : i32
    %62 = arith.extui %61 : i1 to i32
    %c0_i32_39 = arith.constant 0 : i32
    %63 = arith.cmpi ne, %62, %c0_i32_39 : i32
    scf.if %63 {
      %64 = tpu.iota {dimensions = array<i32: 2>} : vector<1x8x128xi32>
      %c0_i32_40 = arith.constant 0 : i32
      %65 = vector.broadcast %c0_i32_40 : i32 to vector<1x8x128xi32>
      %66 = arith.cmpi eq, %64, %65 : vector<1x8x128xi32>
      %c0_41 = arith.constant 0 : index
      %c0_42 = arith.constant 0 : index
      %67 = vector.load %arg7[%c0_41, %c0_42] : memref<8x32xf32, #tpu.memory_space<vmem>>, vector<8x32xf32>
      %68 = vector.shape_cast %67 : vector<8x32xf32> to vector<1x8x32xf32>
      %cst_43 = arith.constant dense<0.000000e+00> : vector<1xf32>
      %69 = vector.multi_reduction <add>, %68, %cst_43 [1, 2] : vector<1x8x32xf32> to vector<1xf32>
      %70 = vector.shape_cast %69 : vector<1xf32> to vector<1x1x1xf32>
      %71 = vector.extract %70[0, 0, 0] : f32 from vector<1x1x1xf32>
      %c1_i32 = arith.constant 1 : i32
      %72 = vector.broadcast %c1_i32 : i32 to vector<1x8x128xi32>
      %73 = arith.cmpi eq, %64, %72 : vector<1x8x128xi32>
      %c0_44 = arith.constant 0 : index
      %c0_45 = arith.constant 0 : index
      %74 = vector.load %arg8[%c0_44, %c0_45] : memref<8x32xf32, #tpu.memory_space<vmem>>, vector<8x32xf32>
      %75 = vector.shape_cast %74 : vector<8x32xf32> to vector<1x8x32xf32>
      %cst_46 = arith.constant dense<0.000000e+00> : vector<1xf32>
      %76 = vector.multi_reduction <add>, %75, %cst_46 [1, 2] : vector<1x8x32xf32> to vector<1xf32>
      %77 = vector.shape_cast %76 : vector<1xf32> to vector<1x1x1xf32>
      %78 = vector.extract %77[0, 0, 0] : f32 from vector<1x1x1xf32>
      %c2_i32_47 = arith.constant 2 : i32
      %79 = vector.broadcast %c2_i32_47 : i32 to vector<1x8x128xi32>
      %80 = arith.cmpi eq, %64, %79 : vector<1x8x128xi32>
      %c0_48 = arith.constant 0 : index
      %c0_49 = arith.constant 0 : index
      %81 = vector.load %arg9[%c0_48, %c0_49] : memref<8x32xf32, #tpu.memory_space<vmem>>, vector<8x32xf32>
      %82 = vector.shape_cast %81 : vector<8x32xf32> to vector<1x8x32xf32>
      %cst_50 = arith.constant dense<0.000000e+00> : vector<1xf32>
      %83 = vector.multi_reduction <add>, %82, %cst_50 [1, 2] : vector<1x8x32xf32> to vector<1xf32>
      %84 = vector.shape_cast %83 : vector<1xf32> to vector<1x1x1xf32>
      %85 = vector.extract %84[0, 0, 0] : f32 from vector<1x1x1xf32>
      %cst_51 = arith.constant 0.000000e+00 : f32
      %86 = vector.broadcast %85 : f32 to vector<1x8x128xf32>
      %87 = vector.broadcast %cst_51 : f32 to vector<1x8x128xf32>
      %88 = arith.select %80, %86, %87 : vector<1x8x128xi1>, vector<1x8x128xf32>
      %89 = vector.broadcast %78 : f32 to vector<1x8x128xf32>
      %90 = arith.select %73, %89, %88 : vector<1x8x128xi1>, vector<1x8x128xf32>
      %91 = vector.broadcast %71 : f32 to vector<1x8x128xf32>
      %92 = arith.select %66, %91, %90 : vector<1x8x128xi1>, vector<1x8x128xf32>
      %c0_52 = arith.constant 0 : index
      %c0_53 = arith.constant 0 : index
      %c0_54 = arith.constant 0 : index
      %93 = vector.load %arg6[%c0_52, %c0_53, %c0_54] : memref<1x8x128xf32, #tpu.memory_space<vmem>>, vector<1x8x128xf32>
      tpu.vector_store %arg6[%c0_52, %c0_53, %c0_54], %92 {strides = array<i32>} : memref<1x8x128xf32, #tpu.memory_space<vmem>>, vector<1x8x128xf32>,
    } else {
    }
    return
  }
  func.func @transform_0(%arg0: i32, %arg1: i32) -> (i32, i32, i32, i32) {
    %c3_i32 = arith.constant 3 : i32
    %0 = arith.muli %arg0, %c3_i32 : i32
    %1 = arith.addi %0, %arg1 : i32
    %c4_i32 = arith.constant 4 : i32
    %2 = arith.minsi %1, %c4_i32 : i32
    %c0_i32 = arith.constant 0 : i32
    %c0_i32_0 = arith.constant 0 : i32
    %c0_i32_1 = arith.constant 0 : i32
    %c0_i32_2 = arith.constant 0 : i32
    return %c0_i32, %c0_i32_0, %2, %c0_i32_1 : i32, i32, i32, i32
  }
  func.func @transform_1(%arg0: i32, %arg1: i32) -> (i32, i32, i32, i32) {
    %c3_i32 = arith.constant 3 : i32
    %0 = arith.muli %arg0, %c3_i32 : i32
    %1 = arith.addi %0, %arg1 : i32
    %c4_i32 = arith.constant 4 : i32
    %2 = arith.minsi %1, %c4_i32 : i32
    %c0_i32 = arith.constant 0 : i32
    %c0_i32_0 = arith.constant 0 : i32
    %c0_i32_1 = arith.constant 0 : i32
    %c0_i32_2 = arith.constant 0 : i32
    return %c0_i32, %c0_i32_0, %2, %c0_i32_1 : i32, i32, i32, i32
  }
  func.func @transform_2(%arg0: i32, %arg1: i32) -> (i32, i32, i32, i32) {
    %c3_i32 = arith.constant 3 : i32
    %0 = arith.muli %arg0, %c3_i32 : i32
    %1 = arith.addi %0, %arg1 : i32
    %c4_i32 = arith.constant 4 : i32
    %2 = arith.minsi %1, %c4_i32 : i32
    %c0_i32 = arith.constant 0 : i32
    %c0_i32_0 = arith.constant 0 : i32
    %c0_i32_1 = arith.constant 0 : i32
    %c0_i32_2 = arith.constant 0 : i32
    return %c0_i32, %c0_i32_0, %2, %c0_i32_1 : i32, i32, i32, i32
  }
  func.func @transform_3(%arg0: i32, %arg1: i32) -> (i32, i32, i32, i32) {
    %c3_i32 = arith.constant 3 : i32
    %0 = arith.muli %arg0, %c3_i32 : i32
    %1 = arith.addi %0, %arg1 : i32
    %c4_i32 = arith.constant 4 : i32
    %2 = arith.minsi %1, %c4_i32 : i32
    %c0_i32 = arith.constant 0 : i32
    %c0_i32_0 = arith.constant 0 : i32
    %c0_i32_1 = arith.constant 0 : i32
    %c0_i32_2 = arith.constant 0 : i32
    return %c0_i32, %c0_i32_0, %2, %c0_i32_1 : i32, i32, i32, i32
  }
  func.func @transform_4(%arg0: i32, %arg1: i32) -> (i32, i32, i32) {
    %c0_i32 = arith.constant 0 : i32
    %c0_i32_0 = arith.constant 0 : i32
    %c0_i32_1 = arith.constant 0 : i32
    return %arg0, %c0_i32, %c0_i32_0 : i32, i32, i32
  }
}

</mosaic_0001>

<llo_original>
// kernel: tpu_custom_call.1
$region0: #{tpu_custom_call.1}
  #allocation0 [shape = 'u32[]', space=smem, size = 0x4, offset = 0x4, fixed_abs, tag = 'smem constant byte address 0x4 - core index']
  #allocation1 [shape = 'u32[72,128]{1,0:T(1,128)}', space=vmem, size = 0x9000, scoped, tag = 'internal scratch']
  #allocation2 [shape = 'f32[8,32]{1,0:T(8,128)}', space=vmem, size = 0x1000, scoped, tag = 'scratch operand']
  #allocation3 [shape = 'f32[8,32]{1,0:T(8,128)}', space=vmem, size = 0x1000, scoped, tag = 'scratch operand']
  #allocation4 [shape = 'f32[8,32]{1,0:T(8,128)}', space=vmem, size = 0x1000, scoped, tag = 'scratch operand']
  %s0 = inlined_call_operand.vmem [shape: f32[2,5,36,32], index: 0, kind: input, shape index: {}]
  %s1 = inlined_call_operand.vmem [shape: f32[2,5,36,32], index: 1, kind: input, shape index: {}]
  %s2 = inlined_call_operand.vmem [shape: f32[2,8,36,32], index: 2, kind: input, shape index: {}]
  %s3 = inlined_call_operand.vmem [shape: s32[2,1,36,32], index: 3, kind: input, shape index: {}]
  %s4 = inlined_call_operand.hbm [shape: f32[2,8,128], index: 4, kind: output, shape index: {}]
  %s5 = sld [smem:[#allocation0]]
  $region209: #{tpu_custom_call.1} parent=0
    _
  %s7 = ssub.s32 1, %s5
  %s8 = scalar_select 0, %s7, %s5
  $region1: #{tpu_custom_call.1} parent=0
    #allocation5 [shape = 'u8[81920]{0}', space=vmem, size = 0x14000, scoped, tag = 'input window, operand 0']
    #allocation6 [shape = 'u8[81920]{0}', space=vmem, size = 0x14000, scoped, tag = 'input window, operand 1']
    #allocation7 [shape = 'u8[131072]{0}', space=vmem, size = 0x20000, scoped, tag = 'input window, operand 2']
    #allocation8 [shape = 'u8[16384]{0}', space=vmem, size = 0x4000, scoped, tag = 'input window, operand 3']
    #allocation9 [shape = 'u8[8192]{0}', space=vmem, size = 0x2000, scoped, tag = 'output window, operand 0']
    #allocation10 [shape = 's32[2]{0}', space=sflag, size = 0x8, scoped, tag = 'scoped memory for tpu_custom_call.1']
    %9 = vsyncpa [#allocation10], 0
    %s10 = scalar_lea.sflag [#allocation10], 1
    %11 = vsyncpa %s10, 0
    loop: start=0, step=1, limit=8
    $region2: #{tpu_custom_call.1} parent=1 // loop_pre_header
      _
    $region3: #{tpu_custom_call.1} parent=1 // loop_header
      %s13 = sphi 0, %s17
      %p14 = scmp.ge.s32.totalorder %s13, 8
      %s20 = sphi 0, %s32
      %s21 = sphi 0, %s28
      %s22 = sphi 0, %s20
      %s23 = sphi 0, %s21
      %s24 = sphi 0, %s22
      %s25 = sphi 0, %s23
      %s43 = sphi 0, %s45
      %s46 = sphi 0, %s43
      %s47 = sphi 0, %s46
      %s63 = sphi 0, %s47
      %s77 = sphi 0, %s79
      %s80 = sphi 0, %s77
      %s81 = sphi 0, %s80
      %s97 = sphi 0, %s81
      %s111 = sphi 0, %s113
      %s114 = sphi 0, %s111
      %s115 = sphi 0, %s114
      %s131 = sphi 0, %s115
      %s145 = sphi 0, %s147
      %s148 = sphi 0, %s145
      %s149 = sphi 0, %s148
      %s165 = sphi 0, %s149
      %s171 = sphi 0, %s173
      %s174 = sphi 0, %s171
      %s175 = sphi 0, %s174
      %s191 = sphi 0, %s175
    $region4: #{tpu_custom_call.1} parent=1 // loop_header_branch
      %16 = sbr.rel (%p14) target = $region8
    $region5: #{tpu_custom_call.1} parent=1 // loop_body
      %s18 = ssub.s32 %s13, 1
      %s19 = ssub.s32 %s13, 2
      %s26 = sadd.s32 1, %s21
      %p27 = scmp.ge.s32.totalorder %s26, 3
      %s28 = scalar_select %p27, 0, %s26
      %s29 = sadd.s32 1, %s20
      %s30 = scalar_select %p27, %s29, %s20
      %p31 = scmp.ge.s32.totalorder %s30, 2
      %s32 = scalar_select %p31, 0, %s30
      %s33 = smul.u32 %s20, 3
      %s34 = sadd.s32 %s33, %s21
      %p35 = scmp.lt.s32.totalorder %s34, 4
      %s36 = scalar_select %p35, %s34, 4
      %s37 = smul.u32 %s32, 3
      %s38 = sadd.s32 %s37, %s28
      %p39 = scmp.lt.s32.totalorder %s38, 4
      %s40 = scalar_select %p39, %s38, 4
      %s41 = ssub.s32 %s36, %s40
      %p42 = scmp.eq.s32.totalorder %s41, 0
      %s44 = sadd.s32 %s43, 1
      %s45 = scalar_select %p42, %s43, %s44
      %p48 = pneg %p42
      %p49 = scmp.eq.s32.totalorder %s13, 5
      %p50 = por %p48, %p49
      %p51 = scmp.ne.s32.totalorder %s43, %s46
      %p52 = scmp.eq.s32.totalorder %s13, 0
      %p53 = por %p51, %p52
      %p54 = scmp.ne.s32.totalorder %s43, %s46
      %p55 = scmp.eq.s32.totalorder %s18, 5
      %p56 = por %p54, %p55
      %p57 = scmp.ne.s32.totalorder %s46, %s47
      %p58 = scmp.eq.s32.totalorder %s18, 0
      %p59 = por %p57, %p58
      %p60 = scmp.ne.s32.totalorder %s46, %s47
      %p61 = scmp.eq.s32.totalorder %s19, 5
      %p62 = por %p60, %p61
      %p64 = scmp.ne.s32.totalorder %s47, %s63
      %p65 = scmp.eq.s32.totalorder %s19, 0
      %p66 = por %p64, %p65
      %s67 = smul.u32 %s20, 3
      %s68 = sadd.s32 %s67, %s21
      %p69 = scmp.lt.s32.totalorder %s68, 4
      %s70 = scalar_select %p69, %s68, 4
      %s71 = smul.u32 %s32, 3
      %s72 = sadd.s32 %s71, %s28
      %p73 = scmp.lt.s32.totalorder %s72, 4
      %s74 = scalar_select %p73, %s72, 4
      %s75 = ssub.s32 %s70, %s74
      %p76 = scmp.eq.s32.totalorder %s75, 0
      %s78 = sadd.s32 %s77, 1
      %s79 = scalar_select %p76, %s77, %s78
      %p82 = pneg %p76
      %p83 = scmp.eq.s32.totalorder %s13, 5
      %p84 = por %p82, %p83
      %p85 = scmp.ne.s32.totalorder %s77, %s80
      %p86 = scmp.eq.s32.totalorder %s13, 0
      %p87 = por %p85, %p86
      %p88 = scmp.ne.s32.totalorder %s77, %s80
      %p89 = scmp.eq.s32.totalorder %s18, 5
      %p90 = por %p88, %p89
      %p91 = scmp.ne.s32.totalorder %s80, %s81
      %p92 = scmp.eq.s32.totalorder %s18, 0
      %p93 = por %p91, %p92
      %p94 = scmp.ne.s32.totalorder %s80, %s81
      %p95 = scmp.eq.s32.totalorder %s19, 5
      %p96 = por %p94, %p95
      %p98 = scmp.ne.s32.totalorder %s81, %s97
      %p99 = scmp.eq.s32.totalorder %s19, 0
      %p100 = por %p98, %p99
      %s101 = smul.u32 %s20, 3
      %s102 = sadd.s32 %s101, %s21
      %p103 = scmp.lt.s32.totalorder %s102, 4
      %s104 = scalar_select %p103, %s102, 4
      %s105 = smul.u32 %s32, 3
      %s106 = sadd.s32 %s105, %s28
      %p107 = scmp.lt.s32.totalorder %s106, 4
      %s108 = scalar_select %p107, %s106, 4
      %s109 = ssub.s32 %s104, %s108
      %p110 = scmp.eq.s32.totalorder %s109, 0
      %s112 = sadd.s32 %s111, 1
      %s113 = scalar_select %p110, %s111, %s112
      %p116 = pneg %p110
      %p117 = scmp.eq.s32.totalorder %s13, 5
      %p118 = por %p116, %p117
      %p119 = scmp.ne.s32.totalorder %s111, %s114
      %p120 = scmp.eq.s32.totalorder %s13, 0
      %p121 = por %p119, %p120
      %p122 = scmp.ne.s32.totalorder %s111, %s114
      %p123 = scmp.eq.s32.totalorder %s18, 5
      %p124 = por %p122, %p123
      %p125 = scmp.ne.s32.totalorder %s114, %s115
      %p126 = scmp.eq.s32.totalorder %s18, 0
      %p127 = por %p125, %p126
      %p128 = scmp.ne.s32.totalorder %s114, %s115
      %p129 = scmp.eq.s32.totalorder %s19, 5
      %p130 = por %p128, %p129
      %p132 = scmp.ne.s32.totalorder %s115, %s131
      %p133 = scmp.eq.s32.totalorder %s19, 0
      %p134 = por %p132, %p133
      %s135 = smul.u32 %s20, 3
      %s136 = sadd.s32 %s135, %s21
      %p137 = scmp.lt.s32.totalorder %s136, 4
      %s138 = scalar_select %p137, %s136, 4
      %s139 = smul.u32 %s32, 3
      %s140 = sadd.s32 %s139, %s28
      %p141 = scmp.lt.s32.totalorder %s140, 4
      %s142 = scalar_select %p141, %s140, 4
      %s143 = ssub.s32 %s138, %s142
      %p144 = scmp.eq.s32.totalorder %s143, 0
      %s146 = sadd.s32 %s145, 1
      %s147 = scalar_select %p144, %s145, %s146
      %p150 = pneg %p144
      %p151 = scmp.eq.s32.totalorder %s13, 5
      %p152 = por %p150, %p151
      %p153 = scmp.ne.s32.totalorder %s145, %s148
      %p154 = scmp.eq.s32.totalorder %s13, 0
      %p155 = por %p153, %p154
      %p156 = scmp.ne.s32.totalorder %s145, %s148
      %p157 = scmp.eq.s32.totalorder %s18, 5
      %p158 = por %p156, %p157
      %p159 = scmp.ne.s32.totalorder %s148, %s149
      %p160 = scmp.eq.s32.totalorder %s18, 0
      %p161 = por %p159, %p160
      %p162 = scmp.ne.s32.totalorder %s148, %s149
      %p163 = scmp.eq.s32.totalorder %s19, 5
      %p164 = por %p162, %p163
      %p166 = scmp.ne.s32.totalorder %s149, %s165
      %p167 = scmp.eq.s32.totalorder %s19, 0
      %p168 = por %p166, %p167
      %s169 = ssub.s32 %s20, %s32
      %p170 = scmp.eq.s32.totalorder %s169, 0
      %s172 = sadd.s32 %s171, 1
      %s173 = scalar_select %p170, %s171, %s172
      %p176 = pneg %p170
      %p177 = scmp.eq.s32.totalorder %s13, 5
      %p178 = por %p176, %p177
      %p179 = scmp.ne.s32.totalorder %s171, %s174
      %p180 = scmp.eq.s32.totalorder %s13, 0
      %p181 = por %p179, %p180
      %p182 = scmp.ne.s32.totalorder %s171, %s174
      %p183 = scmp.eq.s32.totalorder %s18, 5
      %p184 = por %p182, %p183
      %p185 = scmp.ne.s32.totalorder %s174, %s175
      %p186 = scmp.eq.s32.totalorder %s18, 0
      %p187 = por %p185, %p186
      %p188 = scmp.ne.s32.totalorder %s174, %s175
      %p189 = scmp.eq.s32.totalorder %s19, 5
      %p190 = por %p188, %p189
      %p192 = scmp.ne.s32.totalorder %s175, %s191
      %p193 = scmp.eq.s32.totalorder %s19, 0
      %p194 = por %p192, %p193
      %p195 = scmp.le.s32.totalorder 1, %s13
      %p196 = scmp.lt.s32.totalorder %s13, 7
      %p197 = pnand %p195, %p196
      %p198 = pneg %p197
      // Predicated region
      $region9: #{tpu_custom_call.1} parent=5 // pred_check
        _
      $region10: #{tpu_custom_call.1} parent=5 // pred_check_branch
        %200 = sbr.rel (%p197) target = $region12
      $region11: #{tpu_custom_call.1} parent=5 // pred_region
        %s201 = ssub.s32 %s13, 1
      $region12: #{tpu_custom_call.1} parent=5 // pred_fallthru
        _
      %p202 = scmp.lt.s32.totalorder %s13, 6
      // Predicated region
      $region13: #{tpu_custom_call.1} parent=5 // pred_check
        %p203 = pneg %p202
      $region14: #{tpu_custom_call.1} parent=5 // pred_check_branch
        %205 = sbr.rel (%p203) target = $region16
      $region15: #{tpu_custom_call.1} parent=5 // pred_region
        // Predicated region
        $region17: #{tpu_custom_call.1} parent=15 // pred_check
          %p206 = pneg %p53
        $region18: #{tpu_custom_call.1} parent=15 // pred_check_branch
          %208 = sbr.rel (%p206) target = $region20
        $region19: #{tpu_custom_call.1} parent=15 // pred_region
          %s209 = sand.u32 %s43, 1
          %s210 = sand.u32 %s43, 1
          %s211 = smul.addr %s210, 80
          %s212 = scalar_lea.vmem [#allocation5], %s211
          %s213 = smul.u32 %s20, 3
          %s214 = sadd.s32 %s213, %s21
          %p215 = scmp.lt.s32.totalorder %s214, 4
          %s216 = scalar_select %p215, %s214, 4
          %s217 = smul.addr %s216, 8
          %s218 = scalar_lea.vmem %s0, %s217
          // Predicated region
          $region21: #{tpu_custom_call.1} parent=19 // pred_check
            _
          $region22: #{tpu_custom_call.1} parent=19 // pred_check_branch
            %220 = sbr.rel (0) target = $region24
          $region23: #{tpu_custom_call.1} parent=19 // pred_region
            // Predicated region
            $region25: #{tpu_custom_call.1} parent=23 // pred_check
              _
            $region26: #{tpu_custom_call.1} parent=23 // pred_check_branch
              %222 = sbr.rel (0) target = $region28
            $region27: #{tpu_custom_call.1} parent=23 // pred_region
              // Predicated region
              $region40: #{tpu_custom_call.1} parent=27 // pred_check
                _
              $region41: #{tpu_custom_call.1} parent=27 // pred_check_branch
                %256 = sbr.rel (0) target = $region43
              $region42: #{tpu_custom_call.1} parent=27 // pred_region
                loop: start=0, step=1, limit=1
                $region44: #{tpu_custom_call.1} parent=42 // loop_pre_header
                  _
                $region45: #{tpu_custom_call.1} parent=42 // loop_header
                  %s258 = sphi 0, %s262
                  %p259 = scmp.ge.s32.totalorder %s258, 1
                  %s263 = sphi %s218, %s218
                  %s264 = sphi %s212, %s212
                $region46: #{tpu_custom_call.1} parent=42 // loop_header_branch
                  %261 = sbr.rel (%p259) target = $region50
                $region47: #{tpu_custom_call.1} parent=42 // loop_body
                  %v265 = vld [vmem:[%s263] sm:$0xff]
                  %266 = vst [vmem:[%s264] sm:$0xff] %v265
                  %v267 = vld [vmem:[%s263 + $0x28] sm:$0xff]
                  %268 = vst [vmem:[%s264 + $0x8] sm:$0xff] %v267
                  %v269 = vld [vmem:[%s263 + $0x50] sm:$0xff]
                  %270 = vst [vmem:[%s264 + $0x10] sm:$0xff] %v269
                  %v271 = vld [vmem:[%s263 + $0x78] sm:$0xff]
                  %272 = vst [vmem:[%s264 + $0x18] sm:$0xff] %v271
                  %v273 = vld [vmem:[%s263 + $0xa0] sm:$0xff]
                  %274 = vst [vmem:[%s264 + $0x20] sm:$0xff] %v273
                  %v275 = vld [vmem:[%s263 + $0xc8] sm:$0xff]
                  %276 = vst [vmem:[%s264 + $0x28] sm:$0xff] %v275
                  %v277 = vld [vmem:[%s263 + $0xf0] sm:$0xff]
                  %278 = vst [vmem:[%s264 + $0x30] sm:$0xff] %v277
                  %v279 = vld [vmem:[%s263 + $0x118] sm:$0xff]
                  %280 = vst [vmem:[%s264 + $0x38] sm:$0xff] %v279
                  %v281 = vld [vmem:[%s263 + $0x140] sm:$0xff]
                  %282 = vst [vmem:[%s264 + $0x40] sm:$0xff] %v281
                  %v283 = vld [vmem:[%s263 + $0x168] sm:$0xff]
                  %284 = vst [vmem:[%s264 + $0x48] sm:$0xff] %v283
                $region48: #{tpu_custom_call.1} parent=42 // loop_footer
                  %s262 = sadd.s32 1, %s258
                $region49: #{tpu_custom_call.1} parent=42 // loop_footer_branch
                  %257 = sbr.rel target = $region45
                $region50: #{tpu_custom_call.1} parent=42 // loop_exit
                  _
              $region43: #{tpu_custom_call.1} parent=27 // pred_fallthru
                _
              // Predicated region
              $region51: #{tpu_custom_call.1} parent=27 // pred_check
                _
              $region52: #{tpu_custom_call.1} parent=27 // pred_check_branch
                %286 = sbr.rel target = $region54
              $region53: #{tpu_custom_call.1} parent=27 // pred_region
                _
              $region54: #{tpu_custom_call.1} parent=27 // pred_fallthru
                _
            $region28: #{tpu_custom_call.1} parent=23 // pred_fallthru
              _
            // Predicated region
            $region29: #{tpu_custom_call.1} parent=23 // pred_check
              _
            $region30: #{tpu_custom_call.1} parent=23 // pred_check_branch
              %224 = sbr.rel target = $region32
            $region31: #{tpu_custom_call.1} parent=23 // pred_region
              %s226 = ssub.s32 256, 1
              loop: start=0, step=1, limit=1
              $region33: #{tpu_custom_call.1} parent=31 // loop_pre_header
                _
              $region34: #{tpu_custom_call.1} parent=31 // loop_header
                %s228 = sphi 0, %s232
                %p229 = scmp.ge.s32.totalorder %s228, 1
                %s233 = sphi %s218, %s218
                %s234 = sphi %s212, %s212
              $region35: #{tpu_custom_call.1} parent=31 // loop_header_branch
                %231 = sbr.rel (%p229) target = $region39
              $region36: #{tpu_custom_call.1} parent=31 // loop_body
                %v235 = vld [vmem:[%s233] sm:%s226]
                %236 = vst [vmem:[%s234] sm:%s226] %v235
                %v237 = vld [vmem:[%s233 + $0x28] sm:%s226]
                %238 = vst [vmem:[%s234 + $0x8] sm:%s226] %v237
                %v239 = vld [vmem:[%s233 + $0x50] sm:%s226]
                %240 = vst [vmem:[%s234 + $0x10] sm:%s226] %v239
                %v241 = vld [vmem:[%s233 + $0x78] sm:%s226]
                %242 = vst [vmem:[%s234 + $0x18] sm:%s226] %v241
                %v243 = vld [vmem:[%s233 + $0xa0] sm:%s226]
                %244 = vst [vmem:[%s234 + $0x20] sm:%s226] %v243
                %v245 = vld [vmem:[%s233 + $0xc8] sm:%s226]
                %246 = vst [vmem:[%s234 + $0x28] sm:%s226] %v245
                %v247 = vld [vmem:[%s233 + $0xf0] sm:%s226]
                %248 = vst [vmem:[%s234 + $0x30] sm:%s226] %v247
                %v249 = vld [vmem:[%s233 + $0x118] sm:%s226]
                %250 = vst [vmem:[%s234 + $0x38] sm:%s226] %v249
                %v251 = vld [vmem:[%s233 + $0x140] sm:%s226]
                %252 = vst [vmem:[%s234 + $0x40] sm:%s226] %v251
                %v253 = vld [vmem:[%s233 + $0x168] sm:%s226]
                %254 = vst [vmem:[%s234 + $0x48] sm:%s226] %v253
              $region37: #{tpu_custom_call.1} parent=31 // loop_footer
                %s232 = sadd.s32 1, %s228
              $region38: #{tpu_custom_call.1} parent=31 // loop_footer_branch
                %227 = sbr.rel target = $region34
              $region39: #{tpu_custom_call.1} parent=31 // loop_exit
                _
            $region32: #{tpu_custom_call.1} parent=23 // pred_fallthru
              _
          $region24: #{tpu_custom_call.1} parent=19 // pred_fallthru
            _
          %287 = vnop
        $region20: #{tpu_custom_call.1} parent=15 // pred_fallthru
          _
        // Predicated region
        $region55: #{tpu_custom_call.1} parent=15 // pred_check
          %p288 = pneg %p87
        $region56: #{tpu_custom_call.1} parent=15 // pred_check_branch
          %290 = sbr.rel (%p288) target = $region58
        $region57: #{tpu_custom_call.1} parent=15 // pred_region
          %s291 = sand.u32 %s77, 1
          %s292 = sand.u32 %s77, 1
          %s293 = smul.addr %s292, 80
          %s294 = scalar_lea.vmem [#allocation6], %s293
          %s295 = smul.u32 %s20, 3
          %s296 = sadd.s32 %s295, %s21
          %p297 = scmp.lt.s32.totalorder %s296, 4
          %s298 = scalar_select %p297, %s296, 4
          %s299 = smul.addr %s298, 8
          %s300 = scalar_lea.vmem %s1, %s299
          // Predicated region
          $region59: #{tpu_custom_call.1} parent=57 // pred_check
            _
          $region60: #{tpu_custom_call.1} parent=57 // pred_check_branch
            %302 = sbr.rel (0) target = $region62
          $region61: #{tpu_custom_call.1} parent=57 // pred_region
            // Predicated region
            $region63: #{tpu_custom_call.1} parent=61 // pred_check
              _
            $region64: #{tpu_custom_call.1} parent=61 // pred_check_branch
              %304 = sbr.rel (0) target = $region66
            $region65: #{tpu_custom_call.1} parent=61 // pred_region
              // Predicated region
              $region78: #{tpu_custom_call.1} parent=65 // pred_check
                _
              $region79: #{tpu_custom_call.1} parent=65 // pred_check_branch
                %338 = sbr.rel (0) target = $region81
              $region80: #{tpu_custom_call.1} parent=65 // pred_region
                loop: start=0, step=1, limit=1
                $region82: #{tpu_custom_call.1} parent=80 // loop_pre_header
                  _
                $region83: #{tpu_custom_call.1} parent=80 // loop_header
                  %s340 = sphi 0, %s344
                  %p341 = scmp.ge.s32.totalorder %s340, 1
                  %s345 = sphi %s300, %s300
                  %s346 = sphi %s294, %s294
                $region84: #{tpu_custom_call.1} parent=80 // loop_header_branch
                  %343 = sbr.rel (%p341) target = $region88
                $region85: #{tpu_custom_call.1} parent=80 // loop_body
                  %v347 = vld [vmem:[%s345] sm:$0xff]
                  %348 = vst [vmem:[%s346] sm:$0xff] %v347
                  %v349 = vld [vmem:[%s345 + $0x28] sm:$0xff]
                  %350 = vst [vmem:[%s346 + $0x8] sm:$0xff] %v349
                  %v351 = vld [vmem:[%s345 + $0x50] sm:$0xff]
                  %352 = vst [vmem:[%s346 + $0x10] sm:$0xff] %v351
                  %v353 = vld [vmem:[%s345 + $0x78] sm:$0xff]
                  %354 = vst [vmem:[%s346 + $0x18] sm:$0xff] %v353
                  %v355 = vld [vmem:[%s345 + $0xa0] sm:$0xff]
                  %356 = vst [vmem:[%s346 + $0x20] sm:$0xff] %v355
                  %v357 = vld [vmem:[%s345 + $0xc8] sm:$0xff]
                  %358 = vst [vmem:[%s346 + $0x28] sm:$0xff] %v357
                  %v359 = vld [vmem:[%s345 + $0xf0] sm:$0xff]
                  %360 = vst [vmem:[%s346 + $0x30] sm:$0xff] %v359
                  %v361 = vld [vmem:[%s345 + $0x118] sm:$0xff]
                  %362 = vst [vmem:[%s346 + $0x38] sm:$0xff] %v361
                  %v363 = vld [vmem:[%s345 + $0x140] sm:$0xff]
                  %364 = vst [vmem:[%s346 + $0x40] sm:$0xff] %v363
                  %v365 = vld [vmem:[%s345 + $0x168] sm:$0xff]
                  %366 = vst [vmem:[%s346 + $0x48] sm:$0xff] %v365
                $region86: #{tpu_custom_call.1} parent=80 // loop_footer
                  %s344 = sadd.s32 1, %s340
                $region87: #{tpu_custom_call.1} parent=80 // loop_footer_branch
                  %339 = sbr.rel target = $region83
                $region88: #{tpu_custom_call.1} parent=80 // loop_exit
                  _
              $region81: #{tpu_custom_call.1} parent=65 // pred_fallthru
                _
              // Predicated region
              $region89: #{tpu_custom_call.1} parent=65 // pred_check
                _
              $region90: #{tpu_custom_call.1} parent=65 // pred_check_branch
                %368 = sbr.rel target = $region92
              $region91: #{tpu_custom_call.1} parent=65 // pred_region
                _
              $region92: #{tpu_custom_call.1} parent=65 // pred_fallthru
                _
            $region66: #{tpu_custom_call.1} parent=61 // pred_fallthru
              _
            // Predicated region
            $region67: #{tpu_custom_call.1} parent=61 // pred_check
              _
            $region68: #{tpu_custom_call.1} parent=61 // pred_check_branch
              %306 = sbr.rel target = $region70
            $region69: #{tpu_custom_call.1} parent=61 // pred_region
              %s308 = ssub.s32 256, 1
              loop: start=0, step=1, limit=1
              $region71: #{tpu_custom_call.1} parent=69 // loop_pre_header
                _
              $region72: #{tpu_custom_call.1} parent=69 // loop_header
                %s310 = sphi 0, %s314
                %p311 = scmp.ge.s32.totalorder %s310, 1
                %s315 = sphi %s300, %s300
                %s316 = sphi %s294, %s294
              $region73: #{tpu_custom_call.1} parent=69 // loop_header_branch
                %313 = sbr.rel (%p311) target = $region77
              $region74: #{tpu_custom_call.1} parent=69 // loop_body
                %v317 = vld [vmem:[%s315] sm:%s308]
                %318 = vst [vmem:[%s316] sm:%s308] %v317
                %v319 = vld [vmem:[%s315 + $0x28] sm:%s308]
                %320 = vst [vmem:[%s316 + $0x8] sm:%s308] %v319
                %v321 = vld [vmem:[%s315 + $0x50] sm:%s308]
                %322 = vst [vmem:[%s316 + $0x10] sm:%s308] %v321
                %v323 = vld [vmem:[%s315 + $0x78] sm:%s308]
                %324 = vst [vmem:[%s316 + $0x18] sm:%s308] %v323
                %v325 = vld [vmem:[%s315 + $0xa0] sm:%s308]
                %326 = vst [vmem:[%s316 + $0x20] sm:%s308] %v325
                %v327 = vld [vmem:[%s315 + $0xc8] sm:%s308]
                %328 = vst [vmem:[%s316 + $0x28] sm:%s308] %v327
                %v329 = vld [vmem:[%s315 + $0xf0] sm:%s308]
                %330 = vst [vmem:[%s316 + $0x30] sm:%s308] %v329
                %v331 = vld [vmem:[%s315 + $0x118] sm:%s308]
                %332 = vst [vmem:[%s316 + $0x38] sm:%s308] %v331
                %v333 = vld [vmem:[%s315 + $0x140] sm:%s308]
                %334 = vst [vmem:[%s316 + $0x40] sm:%s308] %v333
                %v335 = vld [vmem:[%s315 + $0x168] sm:%s308]
                %336 = vst [vmem:[%s316 + $0x48] sm:%s308] %v335
              $region75: #{tpu_custom_call.1} parent=69 // loop_footer
                %s314 = sadd.s32 1, %s310
              $region76: #{tpu_custom_call.1} parent=69 // loop_footer_branch
                %309 = sbr.rel target = $region72
              $region77: #{tpu_custom_call.1} parent=69 // loop_exit
                _
            $region70: #{tpu_custom_call.1} parent=61 // pred_fallthru
              _
          $region62: #{tpu_custom_call.1} parent=57 // pred_fallthru
            _
          %369 = vnop
        $region58: #{tpu_custom_call.1} parent=15 // pred_fallthru
          _
        // Predicated region
        $region93: #{tpu_custom_call.1} parent=15 // pred_check
          %p370 = pneg %p121
        $region94: #{tpu_custom_call.1} parent=15 // pred_check_branch
          %372 = sbr.rel (%p370) target = $region96
        $region95: #{tpu_custom_call.1} parent=15 // pred_region
          %s373 = sand.u32 %s111, 1
          %s374 = sand.u32 %s111, 1
          %s375 = smul.addr %s374, 128
          %s376 = scalar_lea.vmem [#allocation7], %s375
          %s377 = smul.u32 %s20, 3
          %s378 = sadd.s32 %s377, %s21
          %p379 = scmp.lt.s32.totalorder %s378, 4
          %s380 = scalar_select %p379, %s378, 4
          %s381 = smul.addr %s380, 8
          %s382 = scalar_lea.vmem %s2, %s381
          // Predicated region
          $region97: #{tpu_custom_call.1} parent=95 // pred_check
            _
          $region98: #{tpu_custom_call.1} parent=95 // pred_check_branch
            %384 = sbr.rel (0) target = $region100
          $region99: #{tpu_custom_call.1} parent=95 // pred_region
            // Predicated region
            $region101: #{tpu_custom_call.1} parent=99 // pred_check
              _
            $region102: #{tpu_custom_call.1} parent=99 // pred_check_branch
              %386 = sbr.rel (0) target = $region104
            $region103: #{tpu_custom_call.1} parent=99 // pred_region
              // Predicated region
              $region116: #{tpu_custom_call.1} parent=103 // pred_check
                _
              $region117: #{tpu_custom_call.1} parent=103 // pred_check_branch
                %432 = sbr.rel (0) target = $region119
              $region118: #{tpu_custom_call.1} parent=103 // pred_region
                loop: start=0, step=1, limit=1
                $region120: #{tpu_custom_call.1} parent=118 // loop_pre_header
                  _
                $region121: #{tpu_custom_call.1} parent=118 // loop_header
                  %s434 = sphi 0, %s438
                  %p435 = scmp.ge.s32.totalorder %s434, 1
                  %s439 = sphi %s382, %s382
                  %s440 = sphi %s376, %s376
                $region122: #{tpu_custom_call.1} parent=118 // loop_header_branch
                  %437 = sbr.rel (%p435) target = $region126
                $region123: #{tpu_custom_call.1} parent=118 // loop_body
                  %v441 = vld [vmem:[%s439] sm:$0xff]
                  %442 = vst [vmem:[%s440] sm:$0xff] %v441
                  %v443 = vld [vmem:[%s439 + $0x28] sm:$0xff]
                  %444 = vst [vmem:[%s440 + $0x8] sm:$0xff] %v443
                  %v445 = vld [vmem:[%s439 + $0x50] sm:$0xff]
                  %446 = vst [vmem:[%s440 + $0x10] sm:$0xff] %v445
                  %v447 = vld [vmem:[%s439 + $0x78] sm:$0xff]
                  %448 = vst [vmem:[%s440 + $0x18] sm:$0xff] %v447
                  %v449 = vld [vmem:[%s439 + $0xa0] sm:$0xff]
                  %450 = vst [vmem:[%s440 + $0x20] sm:$0xff] %v449
                  %v451 = vld [vmem:[%s439 + $0xc8] sm:$0xff]
                  %452 = vst [vmem:[%s440 + $0x28] sm:$0xff] %v451
                  %v453 = vld [vmem:[%s439 + $0xf0] sm:$0xff]
                  %454 = vst [vmem:[%s440 + $0x30] sm:$0xff] %v453
                  %v455 = vld [vmem:[%s439 + $0x118] sm:$0xff]
                  %456 = vst [vmem:[%s440 + $0x38] sm:$0xff] %v455
                  %v457 = vld [vmem:[%s439 + $0x140] sm:$0xff]
                  %458 = vst [vmem:[%s440 + $0x40] sm:$0xff] %v457
                  %v459 = vld [vmem:[%s439 + $0x168] sm:$0xff]
                  %460 = vst [vmem:[%s440 + $0x48] sm:$0xff] %v459
                  %v461 = vld [vmem:[%s439 + $0x190] sm:$0xff]
                  %462 = vst [vmem:[%s440 + $0x50] sm:$0xff] %v461
                  %v463 = vld [vmem:[%s439 + $0x1b8] sm:$0xff]
                  %464 = vst [vmem:[%s440 + $0x58] sm:$0xff] %v463
                  %v465 = vld [vmem:[%s439 + $0x1e0] sm:$0xff]
                  %466 = vst [vmem:[%s440 + $0x60] sm:$0xff] %v465
                  %v467 = vld [vmem:[%s439 + $0x208] sm:$0xff]
                  %468 = vst [vmem:[%s440 + $0x68] sm:$0xff] %v467
                  %v469 = vld [vmem:[%s439 + $0x230] sm:$0xff]
                  %470 = vst [vmem:[%s440 + $0x70] sm:$0xff] %v469
                  %v471 = vld [vmem:[%s439 + $0x258] sm:$0xff]
                  %472 = vst [vmem:[%s440 + $0x78] sm:$0xff] %v471
                $region124: #{tpu_custom_call.1} parent=118 // loop_footer
                  %s438 = sadd.s32 1, %s434
                $region125: #{tpu_custom_call.1} parent=118 // loop_footer_branch
                  %433 = sbr.rel target = $region121
                $region126: #{tpu_custom_call.1} parent=118 // loop_exit
                  _
              $region119: #{tpu_custom_call.1} parent=103 // pred_fallthru
                _
              // Predicated region
              $region127: #{tpu_custom_call.1} parent=103 // pred_check
                _
              $region128: #{tpu_custom_call.1} parent=103 // pred_check_branch
                %474 = sbr.rel target = $region130
              $region129: #{tpu_custom_call.1} parent=103 // pred_region
                _
              $region130: #{tpu_custom_call.1} parent=103 // pred_fallthru
                _
            $region104: #{tpu_custom_call.1} parent=99 // pred_fallthru
              _
            // Predicated region
            $region105: #{tpu_custom_call.1} parent=99 // pred_check
              _
            $region106: #{tpu_custom_call.1} parent=99 // pred_check_branch
              %388 = sbr.rel target = $region108
            $region107: #{tpu_custom_call.1} parent=99 // pred_region
              %s390 = ssub.s32 256, 1
              loop: start=0, step=1, limit=1
              $region109: #{tpu_custom_call.1} parent=107 // loop_pre_header
                _
              $region110: #{tpu_custom_call.1} parent=107 // loop_header
                %s392 = sphi 0, %s396
                %p393 = scmp.ge.s32.totalorder %s392, 1
                %s397 = sphi %s382, %s382
                %s398 = sphi %s376, %s376
              $region111: #{tpu_custom_call.1} parent=107 // loop_header_branch
                %395 = sbr.rel (%p393) target = $region115
              $region112: #{tpu_custom_call.1} parent=107 // loop_body
                %v399 = vld [vmem:[%s397] sm:%s390]
                %400 = vst [vmem:[%s398] sm:%s390] %v399
                %v401 = vld [vmem:[%s397 + $0x28] sm:%s390]
                %402 = vst [vmem:[%s398 + $0x8] sm:%s390] %v401
                %v403 = vld [vmem:[%s397 + $0x50] sm:%s390]
                %404 = vst [vmem:[%s398 + $0x10] sm:%s390] %v403
                %v405 = vld [vmem:[%s397 + $0x78] sm:%s390]
                %406 = vst [vmem:[%s398 + $0x18] sm:%s390] %v405
                %v407 = vld [vmem:[%s397 + $0xa0] sm:%s390]
                %408 = vst [vmem:[%s398 + $0x20] sm:%s390] %v407
                %v409 = vld [vmem:[%s397 + $0xc8] sm:%s390]
                %410 = vst [vmem:[%s398 + $0x28] sm:%s390] %v409
                %v411 = vld [vmem:[%s397 + $0xf0] sm:%s390]
                %412 = vst [vmem:[%s398 + $0x30] sm:%s390] %v411
                %v413 = vld [vmem:[%s397 + $0x118] sm:%s390]
                %414 = vst [vmem:[%s398 + $0x38] sm:%s390] %v413
                %v415 = vld [vmem:[%s397 + $0x140] sm:%s390]
                %416 = vst [vmem:[%s398 + $0x40] sm:%s390] %v415
                %v417 = vld [vmem:[%s397 + $0x168] sm:%s390]
                %418 = vst [vmem:[%s398 + $0x48] sm:%s390] %v417
                %v419 = vld [vmem:[%s397 + $0x190] sm:%s390]
                %420 = vst [vmem:[%s398 + $0x50] sm:%s390] %v419
                %v421 = vld [vmem:[%s397 + $0x1b8] sm:%s390]
                %422 = vst [vmem:[%s398 + $0x58] sm:%s390] %v421
                %v423 = vld [vmem:[%s397 + $0x1e0] sm:%s390]
                %424 = vst [vmem:[%s398 + $0x60] sm:%s390] %v423
                %v425 = vld [vmem:[%s397 + $0x208] sm:%s390]
                %426 = vst [vmem:[%s398 + $0x68] sm:%s390] %v425
                %v427 = vld [vmem:[%s397 + $0x230] sm:%s390]
                %428 = vst [vmem:[%s398 + $0x70] sm:%s390] %v427
                %v429 = vld [vmem:[%s397 + $0x258] sm:%s390]
                %430 = vst [vmem:[%s398 + $0x78] sm:%s390] %v429
              $region113: #{tpu_custom_call.1} parent=107 // loop_footer
                %s396 = sadd.s32 1, %s392
              $region114: #{tpu_custom_call.1} parent=107 // loop_footer_branch
                %391 = sbr.rel target = $region110
              $region115: #{tpu_custom_call.1} parent=107 // loop_exit
                _
            $region108: #{tpu_custom_call.1} parent=99 // pred_fallthru
              _
          $region100: #{tpu_custom_call.1} parent=95 // pred_fallthru
            _
          %475 = vnop
        $region96: #{tpu_custom_call.1} parent=15 // pred_fallthru
          _
        // Predicated region
        $region131: #{tpu_custom_call.1} parent=15 // pred_check
          %p476 = pneg %p155
        $region132: #{tpu_custom_call.1} parent=15 // pred_check_branch
          %478 = sbr.rel (%p476) target = $region134
        $region133: #{tpu_custom_call.1} parent=15 // pred_region
          %s479 = sand.u32 %s145, 1
          %s480 = sand.u32 %s145, 1
          %s481 = smul.addr %s480, 16
          %s482 = scalar_lea.vmem [#allocation8], %s481
          %s483 = smul.u32 %s20, 3
          %s484 = sadd.s32 %s483, %s21
          %p485 = scmp.lt.s32.totalorder %s484, 4
          %s486 = scalar_select %p485, %s484, 4
          %s487 = smul.addr %s486, 8
          %s488 = scalar_lea.vmem %s3, %s487
          // Predicated region
          $region135: #{tpu_custom_call.1} parent=133 // pred_check
            _
          $region136: #{tpu_custom_call.1} parent=133 // pred_check_branch
            %490 = sbr.rel (0) target = $region138
          $region137: #{tpu_custom_call.1} parent=133 // pred_region
            // Predicated region
            $region139: #{tpu_custom_call.1} parent=137 // pred_check
              _
            $region140: #{tpu_custom_call.1} parent=137 // pred_check_branch
              %492 = sbr.rel (0) target = $region142
            $region141: #{tpu_custom_call.1} parent=137 // pred_region
              // Predicated region
              $region154: #{tpu_custom_call.1} parent=141 // pred_check
                _
              $region155: #{tpu_custom_call.1} parent=141 // pred_check_branch
                %510 = sbr.rel (0) target = $region157
              $region156: #{tpu_custom_call.1} parent=141 // pred_region
                loop: start=0, step=1, limit=1
                $region158: #{tpu_custom_call.1} parent=156 // loop_pre_header
                  _
                $region159: #{tpu_custom_call.1} parent=156 // loop_header
                  %s512 = sphi 0, %s516
                  %p513 = scmp.ge.s32.totalorder %s512, 1
                  %s517 = sphi %s488, %s488
                  %s518 = sphi %s482, %s482
                $region160: #{tpu_custom_call.1} parent=156 // loop_header_branch
                  %515 = sbr.rel (%p513) target = $region164
                $region161: #{tpu_custom_call.1} parent=156 // loop_body
                  %v519 = vld [vmem:[%s517] sm:$0xff]
                  %520 = vst [vmem:[%s518] sm:$0xff] %v519
                  %v521 = vld [vmem:[%s517 + $0x28] sm:$0xff]
                  %522 = vst [vmem:[%s518 + $0x8] sm:$0xff] %v521
                $region162: #{tpu_custom_call.1} parent=156 // loop_footer
                  %s516 = sadd.s32 1, %s512
                $region163: #{tpu_custom_call.1} parent=156 // loop_footer_branch
                  %511 = sbr.rel target = $region159
                $region164: #{tpu_custom_call.1} parent=156 // loop_exit
                  _
              $region157: #{tpu_custom_call.1} parent=141 // pred_fallthru
                _
              // Predicated region
              $region165: #{tpu_custom_call.1} parent=141 // pred_check
                _
              $region166: #{tpu_custom_call.1} parent=141 // pred_check_branch
                %524 = sbr.rel target = $region168
              $region167: #{tpu_custom_call.1} parent=141 // pred_region
                _
              $region168: #{tpu_custom_call.1} parent=141 // pred_fallthru
                _
            $region142: #{tpu_custom_call.1} parent=137 // pred_fallthru
              _
            // Predicated region
            $region143: #{tpu_custom_call.1} parent=137 // pred_check
              _
            $region144: #{tpu_custom_call.1} parent=137 // pred_check_branch
              %494 = sbr.rel target = $region146
            $region145: #{tpu_custom_call.1} parent=137 // pred_region
              %s496 = ssub.s32 256, 1
              loop: start=0, step=1, limit=1
              $region147: #{tpu_custom_call.1} parent=145 // loop_pre_header
                _
              $region148: #{tpu_custom_call.1} parent=145 // loop_header
                %s498 = sphi 0, %s502
                %p499 = scmp.ge.s32.totalorder %s498, 1
                %s503 = sphi %s488, %s488
                %s504 = sphi %s482, %s482
              $region149: #{tpu_custom_call.1} parent=145 // loop_header_branch
                %501 = sbr.rel (%p499) target = $region153
              $region150: #{tpu_custom_call.1} parent=145 // loop_body
                %v505 = vld [vmem:[%s503] sm:%s496]
                %506 = vst [vmem:[%s504] sm:%s496] %v505
                %v507 = vld [vmem:[%s503 + $0x28] sm:%s496]
                %508 = vst [vmem:[%s504 + $0x8] sm:%s496] %v507
              $region151: #{tpu_custom_call.1} parent=145 // loop_footer
                %s502 = sadd.s32 1, %s498
              $region152: #{tpu_custom_call.1} parent=145 // loop_footer_branch
                %497 = sbr.rel target = $region148
              $region153: #{tpu_custom_call.1} parent=145 // loop_exit
                _
            $region146: #{tpu_custom_call.1} parent=137 // pred_fallthru
              _
          $region138: #{tpu_custom_call.1} parent=133 // pred_fallthru
            _
          %525 = vnop
        $region134: #{tpu_custom_call.1} parent=15 // pred_fallthru
          _
      $region16: #{tpu_custom_call.1} parent=5 // pred_fallthru
        _
      %p526 = scmp.le.s32.totalorder 1, %s13
      %p527 = scmp.lt.s32.totalorder %s13, 7
      %p528 = pnand %p526, %p527
      %p529 = pneg %p528
      // Predicated region
      $region169: #{tpu_custom_call.1} parent=5 // pred_check
        _
      $region170: #{tpu_custom_call.1} parent=5 // pred_check_branch
        %531 = sbr.rel (%p528) target = $region172
      $region171: #{tpu_custom_call.1} parent=5 // pred_region
        %s532 = ssub.s32 %s13, 1
        %s533 = sand.u32 %s46, 1
        %s534 = sand.u32 %s46, 1
        %s535 = smul.addr %s534, 80
        %s536 = scalar_lea.vmem [#allocation5], %s535
        // Predicated region
        $region173: #{tpu_custom_call.1} parent=171 // pred_check
          %p537 = pneg %p59
        $region174: #{tpu_custom_call.1} parent=171 // pred_check_branch
          %539 = sbr.rel (%p537) target = $region176
        $region175: #{tpu_custom_call.1} parent=171 // pred_region
          _
        $region176: #{tpu_custom_call.1} parent=171 // pred_fallthru
          _
        %s540 = sand.u32 %s80, 1
        %s541 = sand.u32 %s80, 1
        %s542 = smul.addr %s541, 80
        %s543 = scalar_lea.vmem [#allocation6], %s542
        // Predicated region
        $region177: #{tpu_custom_call.1} parent=171 // pred_check
          %p544 = pneg %p93
        $region178: #{tpu_custom_call.1} parent=171 // pred_check_branch
          %546 = sbr.rel (%p544) target = $region180
        $region179: #{tpu_custom_call.1} parent=171 // pred_region
          _
        $region180: #{tpu_custom_call.1} parent=171 // pred_fallthru
          _
        %s547 = sand.u32 %s114, 1
        %s548 = sand.u32 %s114, 1
        %s549 = smul.addr %s548, 128
        %s550 = scalar_lea.vmem [#allocation7], %s549
        // Predicated region
        $region181: #{tpu_custom_call.1} parent=171 // pred_check
          %p551 = pneg %p127
        $region182: #{tpu_custom_call.1} parent=171 // pred_check_branch
          %553 = sbr.rel (%p551) target = $region184
        $region183: #{tpu_custom_call.1} parent=171 // pred_region
          _
        $region184: #{tpu_custom_call.1} parent=171 // pred_fallthru
          _
        %s554 = sand.u32 %s148, 1
        %s555 = sand.u32 %s148, 1
        %s556 = smul.addr %s555, 16
        %s557 = scalar_lea.vmem [#allocation8], %s556
        // Predicated region
        $region185: #{tpu_custom_call.1} parent=171 // pred_check
          %p558 = pneg %p161
        $region186: #{tpu_custom_call.1} parent=171 // pred_check_branch
          %560 = sbr.rel (%p558) target = $region188
        $region187: #{tpu_custom_call.1} parent=171 // pred_region
          _
        $region188: #{tpu_custom_call.1} parent=171 // pred_fallthru
          _
        %s561 = sand.u32 %s46, 1
        %s562 = sand.u32 %s46, 1
        %s563 = smul.addr %s562, 80
        %s564 = scalar_lea.vmem [#allocation5], %s563
        %p565 = pneg %p59
        %p566 = pneg %p56
        %s567 = sand.u32 %s80, 1
        %s568 = sand.u32 %s80, 1
        %s569 = smul.addr %s568, 80
        %s570 = scalar_lea.vmem [#allocation6], %s569
        %p571 = pneg %p93
        %p572 = pneg %p90
        %s573 = sand.u32 %s114, 1
        %s574 = sand.u32 %s114, 1
        %s575 = smul.addr %s574, 128
        %s576 = scalar_lea.vmem [#allocation7], %s575
        %p577 = pneg %p127
        %p578 = pneg %p124
        %s579 = sand.u32 %s148, 1
        %s580 = sand.u32 %s148, 1
        %s581 = smul.addr %s580, 16
        %s582 = scalar_lea.vmem [#allocation8], %s581
        %p583 = pneg %p161
        %p584 = pneg %p158
        %p585 = pneg %p187
        %p586 = pneg %p184
        %s587 = sand.u32 %s174, 1
        %s588 = scalar_lea.sflag [#allocation10], %s587
        %s589 = sand.u32 %s174, 1
        %s590 = smul.addr %s589, 8
        %s591 = scalar_lea.vmem [#allocation9], %s590
        %s592 = smul.u32 %s22, 3
        %s593 = sadd.s32 %s592, %s23
        %p594 = scmp.lt.s32.totalorder %s593, 4
        %s595 = scalar_select %p594, %s593, 4
        %s596 = smul.u32 %s22, 3
        %s597 = sadd.s32 %s596, %s23
        %p598 = scmp.lt.s32.totalorder %s597, 4
        %s599 = scalar_select %p598, %s597, 4
        %s600 = smul.u32 %s22, 3
        %s601 = sadd.s32 %s600, %s23
        %p602 = scmp.lt.s32.totalorder %s601, 4
        %s603 = scalar_select %p602, %s601, 4
        %s604 = smul.u32 %s22, 3
        %s605 = sadd.s32 %s604, %s23
        %p606 = scmp.lt.s32.totalorder %s605, 4
        %s607 = scalar_select %p606, %s605, 4
        %s608 = smul.u32 %s22, 3
        %s609 = sadd.s32 %s608, %s23
        %p610 = scmp.eq.s32.totalorder %s23, 0
        // Predicated region
        $region189: #{tpu_custom_call.1} parent=171 // pred_check
          %p611 = pneg %p610
        $region190: #{tpu_custom_call.1} parent=171 // pred_check_branch
          %613 = sbr.rel (%p611) target = $region192
        $region191: #{tpu_custom_call.1} parent=171 // pred_region
          %vm614 = vcmask 261120
          %615 = vst.msk [vmem:[#allocation2] sm:$0xff] %vm614, 0.0
          %616 = vst.msk [vmem:[#allocation3] sm:$0xff] %vm614, 0.0
          %617 = vst.msk [vmem:[#allocation4] sm:$0xff] %vm614, 0.0
        $region192: #{tpu_custom_call.1} parent=171 // pred_fallthru
          _
        %v618 = vlaneseq
        %v619 = vshrl.u32 %v618, 7
        %s620 = smul.u32 %s609, 8
        %v621 = vstv %s620
        %v622 = vadd.s32 %v621, %v619
        %vm623 = vcmp.lt.s32.totalorder %v622, 36
        %v624 = vld [vmem:[%s536] sm:$0xff]
        %v625 = vld [vmem:[%s536 + $0x8] sm:$0xff]
        %v626 = vld [vmem:[%s536 + $0x10] sm:$0xff]
        %v627 = vld [vmem:[%s536 + $0x18] sm:$0xff]
        %v628 = vld [vmem:[%s536 + $0x20] sm:$0xff]
        %v629 = vld [vmem:[%s536 + $0x28] sm:$0xff]
        %v630 = vld [vmem:[%s536 + $0x30] sm:$0xff]
        %v631 = vld [vmem:[%s536 + $0x38] sm:$0xff]
        %v632 = vld [vmem:[%s536 + $0x40] sm:$0xff]
        %v633 = vld [vmem:[%s536 + $0x48] sm:$0xff]
        %v634 = vld [vmem:[%s543] sm:$0xff]
        %v635 = vld [vmem:[%s543 + $0x8] sm:$0xff]
        %v636 = vld [vmem:[%s543 + $0x10] sm:$0xff]
        %v637 = vld [vmem:[%s543 + $0x18] sm:$0xff]
        %v638 = vld [vmem:[%s543 + $0x20] sm:$0xff]
        %v639 = vld [vmem:[%s543 + $0x28] sm:$0xff]
        %v640 = vld [vmem:[%s543 + $0x30] sm:$0xff]
        %v641 = vld [vmem:[%s543 + $0x38] sm:$0xff]
        %v642 = vld [vmem:[%s543 + $0x40] sm:$0xff]
        %v643 = vld [vmem:[%s543 + $0x48] sm:$0xff]
        %v644 = vsub.f32 %v624, %v634
        %v645 = vsub.f32 %v625, %v635
        %v646 = vsub.f32 %v626, %v636
        %v647 = vsub.f32 %v627, %v637
        %v648 = vsub.f32 %v628, %v638
        %v649 = vsub.f32 %v629, %v639
        %v650 = vsub.f32 %v630, %v640
        %v651 = vsub.f32 %v631, %v641
        %v652 = vsub.f32 %v632, %v642
        %v653 = vsub.f32 %v633, %v643
        %v654 = vld [vmem:[#allocation2] sm:$0xff]
        %v655 = vmul.f32 %v644, %v644
        %v656 = vmul.f32 %v645, %v645
        %v657 = vmul.f32 %v646, %v646
        %v658 = vmul.f32 %v647, %v647
        %v659 = vmul.f32 %v648, %v648
        %v660 = vmul.f32 %v649, %v649
        %v661 = vmul.f32 %v650, %v650
        %v662 = vmul.f32 %v651, %v651
        %v663 = vmul.f32 %v652, %v652
        %v664 = vmul.f32 %v653, %v653
        %v665 = vmul.f32 %v655, 0.000108506945
        %v666 = vmul.f32 %v656, 0.000108506945
        %v667 = vmul.f32 %v657, 0.00021701389
        %v668 = vmul.f32 %v658, 0.00021701389
        %v669 = vmul.f32 %v659, 0.00021701389
        %v670 = vmul.f32 %v660, 0.000108506945
        %v671 = vmul.f32 %v661, 0.000108506945
        %v672 = vmul.f32 %v662, 0.00021701389
        %v673 = vmul.f32 %v663, 0.00021701389
        %v674 = vmul.f32 %v664, 0.00021701389
        %v675 = vsel %vm623, 1, 0
        %vm676 = vcmp.eq.s32.totalorder %v675, 1
        %v677 = vsel %vm676, %v665, 0.0
        %v678 = vsel %vm676, %v666, 0.0
        %v679 = vsel %vm676, %v667, 0.0
        %v680 = vsel %vm676, %v668, 0.0
        %v681 = vsel %vm676, %v669, 0.0
        %v682 = vsel %vm676, %v670, 0.0
        %v683 = vsel %vm676, %v671, 0.0
        %v684 = vsel %vm676, %v672, 0.0
        %v685 = vsel %vm676, %v673, 0.0
        %v686 = vsel %vm676, %v674, 0.0
        %vm687 = vcmask 261120
        %v688 = vsel %vm687, %v677, 0.0
        %v689 = vsel %vm687, %v678, 0.0
        %v690 = vadd.f32 %v688, %v689
        %v691 = vsel %vm687, %v679, 0.0
        %v692 = vadd.f32 %v690, %v691
        %v693 = vsel %vm687, %v680, 0.0
        %v694 = vadd.f32 %v692, %v693
        %v695 = vsel %vm687, %v681, 0.0
        %v696 = vadd.f32 %v694, %v695
        %v697 = vsel %vm687, %v682, 0.0
        %v698 = vadd.f32 %v696, %v697
        %v699 = vsel %vm687, %v683, 0.0
        %v700 = vadd.f32 %v698, %v699
        %v701 = vsel %vm687, %v684, 0.0
        %v702 = vadd.f32 %v700, %v701
        %v703 = vsel %vm687, %v685, 0.0
        %v704 = vadd.f32 %v702, %v703
        %v705 = vsel %vm687, %v686, 0.0
        %v706 = vadd.f32 %v704, %v705
        %v707 = vadd.f32 %v654, %v706
        %708 = vst.msk [vmem:[#allocation2] sm:$0xff] %vm687, %v707
        %v709 = vld [vmem:[%s550] sm:$0xff]
        %v710 = vld [vmem:[%s550 + $0x8] sm:$0xff]
        %v711 = vld [vmem:[%s550 + $0x10] sm:$0xff]
        %v712 = vld [vmem:[%s550 + $0x18] sm:$0xff]
        %v713 = vld [vmem:[%s550 + $0x20] sm:$0xff]
        %v714 = vld [vmem:[%s550 + $0x28] sm:$0xff]
        %v715 = vld [vmem:[%s550 + $0x30] sm:$0xff]
        %v716 = vld [vmem:[%s550 + $0x38] sm:$0xff]
        %v717 = vld [vmem:[%s550 + $0x40] sm:$0xff]
        %v718 = vld [vmem:[%s550 + $0x48] sm:$0xff]
        %v719 = vld [vmem:[%s550 + $0x50] sm:$0xff]
        %v720 = vld [vmem:[%s550 + $0x58] sm:$0xff]
        %v721 = vld [vmem:[%s550 + $0x60] sm:$0xff]
        %v722 = vld [vmem:[%s550 + $0x68] sm:$0xff]
        %v723 = vld [vmem:[%s550 + $0x70] sm:$0xff]
        %v724 = vld [vmem:[%s550 + $0x78] sm:$0xff]
        %v725 = vld [vmem:[%s557] sm:$0xff]
        %v726 = vld [vmem:[%s557 + $0x8] sm:$0xff]
        %vm727 = vcmp.ne.s32.totalorder %v725, 255
        %vm728 = vcmp.ne.s32.totalorder %v726, 255
        %vm729 = vmand %vm727, %vm676
        %vm730 = vmand %vm728, %vm676
        %vm731 = vcmp.eq.s32.totalorder %v725, 0
        %vm732 = vcmp.eq.s32.totalorder %v725, 1
        %vm733 = vcmp.eq.s32.totalorder %v725, 2
        %vm734 = vcmp.eq.s32.totalorder %v725, 3
        %vm735 = vcmp.eq.s32.totalorder %v725, 4
        %vm736 = vcmp.eq.s32.totalorder %v725, 5
        %vm737 = vcmp.eq.s32.totalorder %v725, 6
        %vm738 = vcmp.eq.s32.totalorder %v725, 7
        %vm739 = vcmp.eq.s32.totalorder %v726, 0
        %vm740 = vcmp.eq.s32.totalorder %v726, 1
        %vm741 = vcmp.eq.s32.totalorder %v726, 2
        %vm742 = vcmp.eq.s32.totalorder %v726, 3
        %vm743 = vcmp.eq.s32.totalorder %v726, 4
        %vm744 = vcmp.eq.s32.totalorder %v726, 5
        %vm745 = vcmp.eq.s32.totalorder %v726, 6
        %vm746 = vcmp.eq.s32.totalorder %v726, 7
        %v747 = vsel %vm731, %v709, 0.0
        %v748 = vsel %vm732, %v710, 0.0
        %v749 = vsel %vm733, %v711, 0.0
        %v750 = vsel %vm734, %v712, 0.0
        %v751 = vsel %vm735, %v713, 0.0
        %v752 = vsel %vm736, %v714, 0.0
        %v753 = vsel %vm737, %v715, 0.0
        %v754 = vsel %vm738, %v716, 0.0
        %v755 = vsel %vm739, %v717, 0.0
        %v756 = vsel %vm740, %v718, 0.0
        %v757 = vsel %vm741, %v719, 0.0
        %v758 = vsel %vm742, %v720, 0.0
        %v759 = vsel %vm743, %v721, 0.0
        %v760 = vsel %vm744, %v722, 0.0
        %v761 = vsel %vm745, %v723, 0.0
        %v762 = vsel %vm746, %v724, 0.0
        %v763 = vsel %vm687, %v747, 0.0
        %v764 = vsel %vm687, %v748, 0.0
        %v765 = vadd.f32 %v763, %v764
        %v766 = vsel %vm687, %v749, 0.0
        %v767 = vadd.f32 %v765, %v766
        %v768 = vsel %vm687, %v750, 0.0
        %v769 = vadd.f32 %v767, %v768
        %v770 = vsel %vm687, %v751, 0.0
        %v771 = vadd.f32 %v769, %v770
        %v772 = vsel %vm687, %v752, 0.0
        %v773 = vadd.f32 %v771, %v772
        %v774 = vsel %vm687, %v753, 0.0
        %v775 = vadd.f32 %v773, %v774
        %v776 = vsel %vm687, %v754, 0.0
        %v777 = vadd.f32 %v775, %v776
        %v778 = vsel %vm687, %v755, 0.0
        %v779 = vsel %vm687, %v756, 0.0
        %v780 = vadd.f32 %v778, %v779
        %v781 = vsel %vm687, %v757, 0.0
        %v782 = vadd.f32 %v780, %v781
        %v783 = vsel %vm687, %v758, 0.0
        %v784 = vadd.f32 %v782, %v783
        %v785 = vsel %vm687, %v759, 0.0
        %v786 = vadd.f32 %v784, %v785
        %v787 = vsel %vm687, %v760, 0.0
        %v788 = vadd.f32 %v786, %v787
        %v789 = vsel %vm687, %v761, 0.0
        %v790 = vadd.f32 %v788, %v789
        %v791 = vsel %vm687, %v762, 0.0
        %v792 = vadd.f32 %v790, %v791
        %v793 = vsel %vm729, %v777, 1.0
        %v794 = vsel %vm730, %v792, 1.0
        %v795 = vlog2.pop %v793
        %v796 = vmul.f32 %v795, 0.6931472
        %v797 = vlog2.pop %v794
        %v798 = vmul.f32 %v797, 0.6931472
        %v799 = vsub.f32 0.0, %v796
        %v800 = vsub.f32 0.0, %v798
        %v801 = vld [vmem:[#allocation3] sm:$0xff]
        %v802 = vsel %vm729, %v799, 0.0
        %v803 = vsel %vm730, %v800, 0.0
        %v804 = vsel %vm687, %v802, 0.0
        %v805 = vsel %vm687, %v803, 0.0
        %v806 = vadd.f32 %v804, %v805
        %v807 = vadd.f32 %v801, %v806
        %808 = vst.msk [vmem:[#allocation3] sm:$0xff] %vm687, %v807
        %v809 = vld [vmem:[#allocation4] sm:$0xff]
        %v810 = vsel %vm729, 1, 0
        %v811 = vsel %vm730, 1, 0
        %v812 = vcvt.s32.f32 %v810
        %v813 = vcvt.s32.f32 %v811
        %v814 = vsel %vm687, %v812, 0.0
        %v815 = vsel %vm687, %v813, 0.0
        %v816 = vadd.f32 %v814, %v815
        %v817 = vadd.f32 %v809, %v816
        %818 = vst.msk [vmem:[#allocation4] sm:$0xff] %vm687, %v817
        %p819 = scmp.eq.s32.totalorder %s23, 2
        // Predicated region
        $region193: #{tpu_custom_call.1} parent=171 // pred_check
          %p820 = pneg %p819
        $region194: #{tpu_custom_call.1} parent=171 // pred_check_branch
          %822 = sbr.rel (%p820) target = $region196
        $region195: #{tpu_custom_call.1} parent=171 // pred_region
          %v823 = vlaneseq
          %v824 = vand.u32 %v823, 127
          %vm825 = vcmp.eq.s32.totalorder %v824, 0
          %v826 = vld [vmem:[#allocation2] sm:$0xff]
          %v827 = vsel %vm687, %v826, 0.0
          %828 = vadd.xlane.f32.xlu0 %v827
          %v829 = vpop.xlane.xlu0 %828
          %v830 = vrot.slane %v829, 4
          %v831 = vadd.f32 %v829, %v830
          %v832 = vrot.slane %v831, 2
          %v833 = vadd.f32 %v831, %v832
          %v834 = vrot.slane %v833, 1
          %v835 = vadd.f32 %v833, %v834
          %s836 = vtos %v835
          %vm837 = vcmp.eq.s32.totalorder %v824, 1
          %v838 = vld [vmem:[#allocation3] sm:$0xff]
          %v839 = vsel %vm687, %v838, 0.0
          %840 = vadd.xlane.f32.xlu0 %v839
          %v841 = vpop.xlane.xlu0 %840
          %v842 = vrot.slane %v841, 4
          %v843 = vadd.f32 %v841, %v842
          %v844 = vrot.slane %v843, 2
          %v845 = vadd.f32 %v843, %v844
          %v846 = vrot.slane %v845, 1
          %v847 = vadd.f32 %v845, %v846
          %s848 = vtos %v847
          %vm849 = vcmp.eq.s32.totalorder %v824, 2
          %v850 = vld [vmem:[#allocation4] sm:$0xff]
          %v851 = vsel %vm687, %v850, 0.0
          %852 = vadd.xlane.f32.xlu0 %v851
          %v853 = vpop.xlane.xlu0 %852
          %v854 = vrot.slane %v853, 4
          %v855 = vadd.f32 %v853, %v854
          %v856 = vrot.slane %v855, 2
          %v857 = vadd.f32 %v855, %v856
          %v858 = vrot.slane %v857, 1
          %v859 = vadd.f32 %v857, %v858
          %s860 = vtos %v859
          %v861 = vstv %s860
          %v862 = vsel %vm849, %v861, 0.0
          %v863 = vstv %s848
          %v864 = vsel %vm837, %v863, %v862
          %v865 = vstv %s836
          %v866 = vsel %vm825, %v865, %v864
          %867 = vst [vmem:[%s591] sm:$0xff] %v866
        $region196: #{tpu_custom_call.1} parent=171 // pred_fallthru
          _
        %s868 = sand.u32 %s174, 1
        %s869 = scalar_lea.sflag [#allocation10], %s868
        %s870 = sand.u32 %s174, 1
        %s871 = smul.addr %s870, 8
        %s872 = scalar_lea.vmem [#allocation9], %s871
        // Predicated region
        $region197: #{tpu_custom_call.1} parent=171 // pred_check
          %p873 = pneg %p184
        $region198: #{tpu_custom_call.1} parent=171 // pred_check_branch
          %875 = sbr.rel (%p873) target = $region200
        $region199: #{tpu_custom_call.1} parent=171 // pred_region
          %877 = vsyncadd %s869, 0
          %s878 = smul.addr %s22, 8
          %s879 = scalar_lea.hbm %s4, %s878
          %s881 = sshll.u32 %s872, 4
          %s882 = int_to_ptr.vmem [resolvable:$true] %s881
          %s883 = sshll.u32 %s879, 4
          %s884 = int_to_ptr.hbm [resolvable:$true] %s883
          %886 = dma.vmem_to_hbm [thread:$0]  %s882, 128, %s884, %s869
        $region200: #{tpu_custom_call.1} parent=171 // pred_fallthru
          _
      $region172: #{tpu_custom_call.1} parent=5 // pred_fallthru
        _
      %p887 = scmp.le.s32.totalorder 2, %s13
      // Predicated region
      $region201: #{tpu_custom_call.1} parent=5 // pred_check
        %p888 = pneg %p887
      $region202: #{tpu_custom_call.1} parent=5 // pred_check_branch
        %890 = sbr.rel (%p888) target = $region204
      $region203: #{tpu_custom_call.1} parent=5 // pred_region
        %s891 = ssub.s32 %s13, 2
        // Predicated region
        $region205: #{tpu_custom_call.1} parent=203 // pred_check
          %p892 = pneg %p190
        $region206: #{tpu_custom_call.1} parent=203 // pred_check_branch
          %894 = sbr.rel (%p892) target = $region208
        $region207: #{tpu_custom_call.1} parent=203 // pred_region
          %s895 = sand.u32 %s175, 1
          %s896 = scalar_lea.sflag [#allocation10], %s895
          %s897 = sand.u32 %s175, 1
          %s898 = smul.addr %s897, 8
          %s899 = scalar_lea.vmem [#allocation9], %s898
          %901 = dma.done %s896, 128
        $region208: #{tpu_custom_call.1} parent=203 // pred_fallthru
          _
      $region204: #{tpu_custom_call.1} parent=5 // pred_fallthru
        _
    $region6: #{tpu_custom_call.1} parent=1 // loop_footer
      %s17 = sadd.s32 1, %s13
    $region7: #{tpu_custom_call.1} parent=1 // loop_footer_branch
      %12 = sbr.rel target = $region3
    $region8: #{tpu_custom_call.1} parent=1 // loop_exit
      _
    %902 = vsyncpa [#allocation10], 1
    %s903 = scalar_lea.sflag [#allocation10], 1
    %904 = vsyncpa %s903, 1

</llo_original>
